<compile_context>
chip_gen: v7x
topology: tpu7x:2x2x1
jax: 0.10.0
libtpu: 0.0.40
codegen_flags: <defaults>
</compile_context>

<pallas_src>
import functools

import jax
import jax.numpy as jnp
from jax.experimental import pallas as pl
from jax.experimental.pallas import tpu as pltpu


def _rmsnorm_kernel(x_ref, scale_ref, o_ref, *, d_x, eps):
    # x_ref: (tr, D) tile in VMEM; scale_ref: (1, D); o_ref: (tr, D)
    x = x_ref[...].astype(jnp.float32)
    D = x.shape[-1]
    if d_x == D:
        sum_sq = jnp.sum(x * x, axis=-1, keepdims=True)            # (tr, 1)
    elif d_x % 128 == 0:
        # Lane-aligned prefix: plain slice is free (no layout shuffle).
        xp = x[:, :d_x]
        sum_sq = jnp.sum(xp * xp, axis=-1, keepdims=True)
    else:
        # Partial RMS: (1, D) lane mask computed once, broadcast in the where
        # (cheaper in vregs than a full (tr, D) iota, hides under HBM stream).
        lane = jax.lax.broadcasted_iota(jnp.int32, (1, D), dimension=1)
        xm = jnp.where(lane < d_x, x, 0.0)
        sum_sq = jnp.sum(xm * xm, axis=-1, keepdims=True)
    rms_x = jnp.sqrt(sum_sq) * (float(d_x) ** -0.5)                 # L2 / sqrt(d)
    # Exact divide (mem-bound kernel: costs no wall-clock, matches PyTorch).
    out = scale_ref[...].astype(jnp.float32) * (x / (rms_x + eps))
    o_ref[...] = out.astype(o_ref.dtype)


def _tpu_defaults():
    """(target_block_bytes, vmem_budget_bytes, min_grid_steps) per generation."""
    try:
        info = pltpu.get_tpu_info()
        vmem_cap = int(getattr(info, "vmem_capacity_bytes", 128 << 20))
    except Exception:
        # Unknown backend (e.g. interpret mode on CPU): assume the smallest
        # VMEM (v7x, 64 MiB per TC) so the limits are always safe.
        vmem_cap = 64 << 20
    if vmem_cap <= (64 << 20):
        # v7x: ~3.2 TB/s HBM -> larger blocks to amortize the ~0.35us/step
        # overhead; keep double-buffered in+out + f32 upcast well under 64 MiB;
        # >= 8 grid steps so the 1-D 'parallel' axis feeds both TensorCores.
        return 6 << 20, 48 << 20, 8
    # 128 MiB parts (v5e / v6e): 2-4 MiB blocks already sit near the HBM
    # roofline; >= 2 steps keeps the DMA pipeline overlapped.
    return 4 << 20, 96 << 20, 2


def _choose_tile_rows(rows, D, itemsize, target_block_bytes, min_grid_steps):
    """Sublane-aligned row tile sized by a block-byte target (no row cap)."""
    sublane = max(32 // itemsize, 8)            # 8 (f32), 16 (bf16), 32 (int8)
    row_bytes = max(D * itemsize, 1)
    tr = max(target_block_bytes // row_bytes, sublane)
    tr = (tr // sublane) * sublane
    rows_aligned = ((rows + sublane - 1) // sublane) * sublane
    tr = min(tr, rows_aligned)                  # never exceed the problem
    # Keep the grid at least `min_grid_steps` long when the problem allows it.
    if rows_aligned >= min_grid_steps * sublane:
        per_step = -(-rows_aligned // min_grid_steps)       # cdiv
        per_step = ((per_step + sublane - 1) // sublane) * sublane
        tr = min(tr, per_step)
    return max(tr, sublane)


def rms_norm(x, scale, *, eps: float = 1e-5, partial: float = 0.0,
             tile_rows: int | None = None):
    """RMSNorm forward. x: (B, T, D), scale: (D,). Returns (B, T, D)."""
    B, T, D = x.shape
    assert scale.shape == (D,)

    use_partial = 0.0 < partial < 1.0
    d_x = int(D * partial) if use_partial else D
    assert d_x >= 1, "partial * normalized_shape must be >= 1"

    rows = B * T
    x2d = x.reshape(rows, D)
    scale2d = scale.reshape(1, D)

    itemsize = jnp.dtype(x.dtype).itemsize
    target_block_bytes, vmem_budget, min_grid_steps = _tpu_defaults()
    tr = tile_rows if tile_rows is not None else _choose_tile_rows(
        rows, D, itemsize, target_block_bytes, min_grid_steps)

    # Ragged last block handled by Pallas (per-row op: padded rows in the
    # overhang are harmless, OOB stores are dropped) — no host-side pad/slice.
    grid = (pl.cdiv(rows, tr),)

    # VMEM budget: double-buffered input + output blocks, f32 upcast of one
    # tile, the scale row, plus headroom.  Clamped to the per-generation cap.
    block_bytes = tr * D * itemsize
    needed = 2 * (2 * block_bytes) + tr * D * 4 + 2 * D * 4 + (4 << 20)
    vmem_limit = int(min(max(needed, 16 << 20), vmem_budget))

    kernel = functools.partial(_rmsnorm_kernel, d_x=d_x, eps=eps)

    out2d = pl.pallas_call(
        kernel,
        out_shape=jax.ShapeDtypeStruct((rows, D), x.dtype),
        grid_spec=pltpu.PrefetchScalarGridSpec(
            num_scalar_prefetch=0,
            grid=grid,
            in_specs=[
                pl.BlockSpec((tr, D), lambda i: (i, 0)),   # x tile
                pl.BlockSpec((1, D), lambda i: (0, 0)),    # scale (broadcast)
            ],
            out_specs=pl.BlockSpec((tr, D), lambda i: (i, 0)),
        ),
        compiler_params=pltpu.CompilerParams(
            dimension_semantics=("parallel",),
            vmem_limit_bytes=vmem_limit),
    )(x2d, scale2d)

    return out2d.reshape(B, T, D)


def _rms_norm_ref(x, scale, *, eps=1e-5, partial=0.0):
    """Pure-JAX reference mirroring the PyTorch module."""
    D = x.shape[-1]
    if 0.0 < partial < 1.0:
        d_x = int(D * partial)
        xp = x[..., :d_x]
    else:
        d_x = D
        xp = x
    norm_x = jnp.sqrt(jnp.sum(jnp.square(xp.astype(jnp.float32)), axis=-1,
                              keepdims=True))
    rms_x = norm_x * (float(d_x) ** -0.5)
    return (scale * (x.astype(jnp.float32) / (rms_x + eps))).astype(x.dtype)


if __name__ == "__main__":
    key = jax.random.PRNGKey(0)
    B, T, D = 2, 8, 32          # (B, T, D_hidden)

    x = jax.random.normal(key, (B, T, D), dtype=jnp.float32)
    # Deterministic parameter init: scale = ones(normalized_shape), as in __init__.
    scale = jnp.ones((D,), dtype=jnp.float32)

    # Full RMSNorm (partial=0.0)
    out_full = rms_norm(x, scale, eps=1e-5, partial=0.0)
    jax.block_until_ready(out_full)
    ref_full = _rms_norm_ref(x, scale, eps=1e-5, partial=0.0)
    assert jnp.allclose(out_full, ref_full, atol=1e-5, rtol=1e-5), (
        "full RMSNorm mismatch, max abs err = "
        f"{float(jnp.max(jnp.abs(out_full - ref_full)))}")

    # Partial RMSNorm (partial=0.5) — stats from first half of features.
    out_part = rms_norm(x, scale, eps=1e-5, partial=0.5)
    jax.block_until_ready(out_part)
    ref_part = _rms_norm_ref(x, scale, eps=1e-5, partial=0.5)
    assert jnp.allclose(out_part, ref_part, atol=1e-5, rtol=1e-5), (
        "partial RMSNorm mismatch, max abs err = "
        f"{float(jnp.max(jnp.abs(out_part - ref_part)))}")

    print("KERNEL_OK")
</pallas_src>

<mosaic_0001>
module attributes {stable_mosaic.version = 11 : i64} {
  func.func @_rmsnorm_kernel(%arg0: i32, %arg1: memref<16x32xf32, #tpu.memory_space<vmem>>, %arg2: memref<1x32xf32, #tpu.memory_space<vmem>>, %arg3: memref<16x32xf32, #tpu.memory_space<vmem>>) attributes {dimension_semantics = [#tpu.dimension_semantics<parallel>], iteration_bounds = array<i64: 1>, scalar_prefetch = 0 : i64, scratch_operands = 0 : i64, tpu.core_type = #tpu.core_type<tc>, window_params = [{transform_indices = @transform_0, window_bounds = array<i64: 16, 32>}, {pipeline_mode = #tpu.pipeline_mode<synchronous>, transform_indices = @transform_1, window_bounds = array<i64: 1, 32>}, {transform_indices = @transform_2, window_bounds = array<i64: 16, 32>}]} {
    %c0 = arith.constant 0 : index
    %c0_0 = arith.constant 0 : index
    %0 = vector.load %arg1[%c0, %c0_0] : memref<16x32xf32, #tpu.memory_space<vmem>>, vector<16x32xf32>
    %1 = arith.mulf %0, %0 : vector<16x32xf32>
    %cst = arith.constant dense<0.000000e+00> : vector<16xf32>
    %2 = vector.multi_reduction <add>, %1, %cst [1] : vector<16x32xf32> to vector<16xf32>
    %3 = vector.shape_cast %2 : vector<16xf32> to vector<16x1xf32>
    %4 = math.sqrt %3 : vector<16x1xf32>
    %cst_1 = arith.constant 0.176776692 : f32
    %5 = vector.broadcast %cst_1 : f32 to vector<16x1xf32>
    %6 = arith.mulf %4, %5 : vector<16x1xf32>
    %c0_2 = arith.constant 0 : index
    %c0_3 = arith.constant 0 : index
    %7 = vector.load %arg2[%c0_2, %c0_3] : memref<1x32xf32, #tpu.memory_space<vmem>>, vector<1x32xf32>
    %cst_4 = arith.constant 9.99999974E-6 : f32
    %8 = vector.broadcast %cst_4 : f32 to vector<16x1xf32>
    %9 = arith.addf %6, %8 : vector<16x1xf32>
    %10 = vector.broadcast %9 : vector<16x1xf32> to vector<16x32xf32>
    %11 = arith.divf %0, %10 : vector<16x32xf32>
    %12 = vector.broadcast %7 : vector<1x32xf32> to vector<16x32xf32>
    %13 = arith.mulf %12, %11 : vector<16x32xf32>
    %c0_5 = arith.constant 0 : index
    %c0_6 = arith.constant 0 : index
    %14 = vector.load %arg3[%c0_5, %c0_6] : memref<16x32xf32, #tpu.memory_space<vmem>>, vector<16x32xf32>
    tpu.vector_store %arg3[%c0_5, %c0_6], %13 {strides = array<i32>} : memref<16x32xf32, #tpu.memory_space<vmem>>, vector<16x32xf32>,
    return
  }
  func.func @transform_0(%arg0: i32) -> (i32, i32) {
    %c0_i32 = arith.constant 0 : i32
    %c0_i32_0 = arith.constant 0 : i32
    return %arg0, %c0_i32 : i32, i32
  }
  func.func @transform_1(%arg0: i32) -> (i32, i32) {
    %c0_i32 = arith.constant 0 : i32
    %c0_i32_0 = arith.constant 0 : i32
    %c0_i32_1 = arith.constant 0 : i32
    return %c0_i32, %c0_i32_0 : i32, i32
  }
  func.func @transform_2(%arg0: i32) -> (i32, i32) {
    %c0_i32 = arith.constant 0 : i32
    %c0_i32_0 = arith.constant 0 : i32
    return %arg0, %c0_i32 : i32, i32
  }
}

</mosaic_0001>

<llo_original>
// kernel: tpu_custom_call.1
$region0: #{tpu_custom_call.1}
  #allocation0 [shape = 'u32[]', space=smem, size = 0x4, offset = 0x4, fixed_abs, tag = 'smem constant byte address 0x4 - core index']
  #allocation1 [shape = 'u32[144,128]{1,0:T(1,128)}', space=vmem, size = 0x12000, scoped, tag = 'internal scratch']
  %s0 = inlined_call_operand.hbm [shape: f32[16,32], index: 0, kind: input, shape index: {}]
  %s1 = inlined_call_operand.vmem [shape: f32[1,32], index: 1, kind: input, shape index: {}]
  %s2 = inlined_call_operand.hbm [shape: f32[16,32], index: 2, kind: output, shape index: {}]
  %s3 = sld [smem:[#allocation0]]
  $region22: #{tpu_custom_call.1} parent=0
    _
  %s5 = ssub.s32 1, %s3
  %s6 = scalar_select 0, %s5, %s3
  $region1: #{tpu_custom_call.1} parent=0
    #allocation2 [shape = 'u8[8192]{0}', space=vmem, size = 0x2000, scoped, tag = 'input window, operand 0, single buffered']
    #allocation3 [shape = 's32[1]{0}', space=sflag, size = 0x4, scoped, tag = 'scoped memory for tpu_custom_call.1']
    #allocation4 [shape = 's32[1]{0}', space=sflag, size = 0x4, scoped, tag = 'scoped memory for tpu_custom_call.1']
    #allocation5 [shape = 'u8[8192]{0}', space=vmem, size = 0x2000, scoped, tag = 'output window, operand 0, single buffered']
    %7 = vsyncpa [#allocation3], 0
    %8 = vsyncpa [#allocation4], 0
    // Predicated region
    $region2: #{tpu_custom_call.1} parent=1 // pred_check
      _
    $region3: #{tpu_custom_call.1} parent=1 // pred_check_branch
      %10 = sbr.rel (0) target = $region5
    $region4: #{tpu_custom_call.1} parent=1 // pred_region
      %s12 = ssub.s32 256, 256
      %13 = vsyncadd [#allocation3], %s12
      %s14 = sshll.u32 [#allocation2], 4
      %s15 = int_to_ptr.vmem [resolvable:$true] %s14
      %20 = dma.hbm_to_vmem [thread:$0]  %s0, 256, %s15, [#allocation3], 128, 128, 8
    $region5: #{tpu_custom_call.1} parent=1 // pred_fallthru
      _
    // Predicated region
    $region6: #{tpu_custom_call.1} parent=1 // pred_check
      _
    $region7: #{tpu_custom_call.1} parent=1 // pred_check_branch
      %22 = sbr.rel (0) target = $region9
    $region8: #{tpu_custom_call.1} parent=1 // pred_region
      _
    $region9: #{tpu_custom_call.1} parent=1 // pred_fallthru
      _
    // Predicated region
    $region10: #{tpu_custom_call.1} parent=1 // pred_check
      _
    $region11: #{tpu_custom_call.1} parent=1 // pred_check_branch
      %24 = sbr.rel (0) target = $region13
    $region12: #{tpu_custom_call.1} parent=1 // pred_region
      %25 = dma.done [#allocation3], 256
    $region13: #{tpu_custom_call.1} parent=1 // pred_fallthru
      _
    %v26 = vld [vmem:[#allocation2] sm:$0xff]
    %v27 = vld [vmem:[#allocation2 + $0x8] sm:$0xff]
    %v28 = vmul.f32 %v26, %v26
    %v29 = vmul.f32 %v27, %v27
    %vm30 = vcmask 261120
    %v31 = vsel %vm30, %v28, 0.0
    %32 = vadd.xlane.f32.xlu0 %v31
    %v33 = vpop.xlane.xlu0 %32
    %v34 = vsel %vm30, %v29, 0.0
    %35 = vadd.xlane.f32.xlu0 %v34
    %v36 = vpop.xlane.xlu0 %35
    %v37 = vrsqrt.pop %v33
    %v38 = vmul.f32 %v33, %v37
    %vm39 = vcmp.eq.f32.partialorder %v33, inf
    %v40 = vsel %vm39, %v33, %v38
    %vm41 = vcmp.eq.f32.partialorder %v33, 0.0
    %v42 = vand.u32 %v33, 2147483648
    %v43 = vsel %vm41, %v42, %v40
    %v44 = vrsqrt.pop %v36
    %v45 = vmul.f32 %v36, %v44
    %vm46 = vcmp.eq.f32.partialorder %v36, inf
    %v47 = vsel %vm46, %v36, %v45
    %vm48 = vcmp.eq.f32.partialorder %v36, 0.0
    %v49 = vand.u32 %v36, 2147483648
    %v50 = vsel %vm48, %v49, %v47
    %v51 = vmul.f32 %v43, 0.17677669
    %v52 = vmul.f32 %v50, 0.17677669
    %v53 = vld [vmem:[%s1] sm:$0x1]
    %v54 = vadd.f32 %v51, 1e-05
    %v55 = vadd.f32 %v52, 1e-05
    %v56 = vrcp.pop %v54
    %v57 = vmul.f32 %v26, %v56
    %v58 = vrcp.pop %v55
    %v59 = vmul.f32 %v27, %v58
    %v61 = vlaneseq
    %v62 = vshrl.u32 %v61, 7
    %v63 = vsub.s32 0, %v62
    %v64 = vrot.slane %v53, %v63
    %v66 = vmul.f32 %v64, %v57
    %v67 = vmul.f32 %v64, %v59
    %68 = vst.msk [vmem:[#allocation5] sm:$0xff] %vm30, %v66
    %69 = vst.msk [vmem:[#allocation5 + $0x8] sm:$0xff] %vm30, %v67
    // Predicated region
    $region14: #{tpu_custom_call.1} parent=1 // pred_check
      _
    $region15: #{tpu_custom_call.1} parent=1 // pred_check_branch
      %71 = sbr.rel (0) target = $region17
    $region16: #{tpu_custom_call.1} parent=1 // pred_region
      %s73 = ssub.s32 256, 256
      %74 = vsyncadd [#allocation4], %s73
      %s75 = sshll.u32 [#allocation5], 4
      %s76 = int_to_ptr.vmem [resolvable:$true] %s75
      %81 = dma.vmem_to_hbm [thread:$0]  %s76, 256, %s2, [#allocation4], 128, 128, 8
    $region17: #{tpu_custom_call.1} parent=1 // pred_fallthru
      _
    // Predicated region
    $region18: #{tpu_custom_call.1} parent=1 // pred_check
      _
    $region19: #{tpu_custom_call.1} parent=1 // pred_check_branch
      %83 = sbr.rel (0) target = $region21
    $region20: #{tpu_custom_call.1} parent=1 // pred_region
      %84 = dma.done [#allocation4], 256
    $region21: #{tpu_custom_call.1} parent=1 // pred_fallthru
      _
    %85 = vsyncpa [#allocation3], 1
    %86 = vsyncpa [#allocation4], 1

</llo_original>
